<compile_context>
chip_gen: v6e
topology: v6e:2x2x1
jax: 0.10.0
libtpu: 0.0.40
codegen_flags: <defaults>
</compile_context>

<pallas_src>
import functools

import jax
import jax.numpy as jnp
from jax import lax
from jax.experimental import pallas as pl
from jax.experimental.pallas import tpu as pltpu


def _channel_attention_kernel(x_ref, w1t_ref, w2t_ref, o_ref,
                              sum_acc, max_acc, *, hw_total, hw_tile):
    # x_ref   : (Bt, C, hw_tile)   transport dtype (f32 by default)
    # w1t_ref : (C, Cr) f32        fc1 weight, pre-transposed
    # w2t_ref : (Cr, C) f32        fc2 weight, pre-transposed
    # o_ref   : (Bt, 1, C) f32     sigmoid(fc2(relu(fc1(avg))) + fc2(relu(fc1(max))))
    # sum_acc / max_acc : (Bt, C) f32 running spatial reductions.
    #
    # NOTE: the spatial (reduction) axis MUST stay the innermost grid axis —
    # the accumulators are only re-initialized at s == 0, so reordering the
    # grid would mix batch groups.
    s = pl.program_id(1)
    ns = pl.num_programs(1)

    @pl.when(s == 0)
    def _init():
        sum_acc[...] = jnp.zeros_like(sum_acc)
        max_acc[...] = jnp.full_like(max_acc, -jnp.inf)

    # Upcast right after the load; all math stays f32 (v5e has no bf16 VPU/EUP).
    x = x_ref[...].astype(jnp.float32)                      # (Bt, C, hw_tile)

    def _accumulate(x_sum, x_max):
        sum_acc[...] += jnp.sum(x_sum, axis=-1)                             # (Bt, C)
        max_acc[...] = jnp.maximum(max_acc[...], jnp.max(x_max, axis=-1))   # (Bt, C)

    if hw_total % hw_tile == 0:
        # All tiles fully valid: steady-state step is pure load + add/max.
        _accumulate(x, x)
    else:
        @pl.when(s < ns - 1)
        def _steady():
            _accumulate(x, x)

        @pl.when(s == ns - 1)
        def _tail():
            # Mask out padded lanes of the last (partial) spatial tile only.
            start = s * hw_tile
            idx = lax.broadcasted_iota(jnp.int32, x.shape, 2)
            valid = (start + idx) < hw_total
            _accumulate(jnp.where(valid, x, 0.0), jnp.where(valid, x, -jnp.inf))

    @pl.when(s == ns - 1)
    def _finalize():
        bt = o_ref.shape[0]
        avg = sum_acc[...] * (1.0 / hw_total)               # (Bt, C)
        mx = max_acc[...]                                   # (Bt, C)
        # Fuse both MLP paths into a single matmul pair on (2*Bt, C).
        pooled = jnp.concatenate([avg, mx], axis=0)         # (2*Bt, C)
        h = jnp.maximum(
            jnp.dot(pooled, w1t_ref[...],
                    preferred_element_type=jnp.float32), 0.0)   # (2*Bt, Cr)
        o = jnp.dot(h, w2t_ref[...],
                    preferred_element_type=jnp.float32)         # (2*Bt, C)
        # Lane-dense store: C on the lane axis.
        o_ref[:, 0, :] = jax.nn.sigmoid(o[0:bt, :] + o[bt:2 * bt, :])


_VMEM_CAPACITY = None


def _vmem_capacity_bytes():
    """Physical VMEM per TensorCore; conservative v7x fallback if unknown."""
    global _VMEM_CAPACITY
    if _VMEM_CAPACITY is None:
        try:
            _VMEM_CAPACITY = int(pltpu.get_tpu_info().vmem_capacity_bytes)
        except Exception:
            _VMEM_CAPACITY = 64 << 20
    return _VMEM_CAPACITY


def _budgets(x_block_bytes):
    """(per-buffer x-tile budget, base vmem_limit, physical capacity)."""
    cap = _vmem_capacity_bytes()
    if cap >= (128 << 20):          # v5e / v6e: 128 MiB physical
        default_block, base_limit = 16 << 20, 64 << 20
    else:                           # v7x: 64 MiB per TC
        default_block, base_limit = 12 << 20, 48 << 20
    if x_block_bytes is None:
        x_block_bytes = default_block
    return int(x_block_bytes), int(base_limit), int(cap)


def _choose_tiles(B, C, HW, itemsize, budget):
    """Pick (bt, hw_tile).

    bt: largest divisor of B that (a) keeps B // bt >= 2 whenever B >= 2 so
        the 'parallel' batch axis can feed both v7x TensorCores, and (b)
        leaves room in the budget for at least one 128-lane spatial chunk.
    hw_tile: largest multiple of 128 (or HW itself) whose (bt, C, hw_tile)
        tile fits the per-buffer budget; shrinks for large C instead of
        blowing the VMEM limit.
    """
    bt_cap = B if B < 2 else B // 2
    min_hw = HW if HW < 128 else 128
    bt = 1
    for d in range(1, B + 1):
        if B % d == 0 and d <= bt_cap and d * C * min_hw * itemsize <= budget:
            bt = d

    per_hw_elem = bt * C * itemsize
    hw_fit = max(1, budget // per_hw_elem)
    if hw_fit >= HW:
        hw_tile = HW
    else:
        hw_tile = max(128, (hw_fit // 128) * 128)   # lane-dim must be 128-multiple
        hw_tile = min(hw_tile, HW)
    return bt, hw_tile


def channel_attention(x, w1, w2, *, transport_dtype=None, x_block_bytes=None):
    """ChannelAttention.forward.

    x: [B, C, H, W]; w1: [Cr, C] (fc1, 1x1 conv); w2: [C, Cr] (fc2, 1x1 conv).
    Returns sigmoid(fc2(relu(fc1(avgpool(x)))) + fc2(relu(fc1(maxpool(x)))))
    with shape [B, C, 1, 1].

    transport_dtype: optional opt-in narrow transport for the x DMA (e.g.
    jnp.bfloat16).  Default None keeps x's own dtype — no extra cast pass.
    """
    B, C, H, W = x.shape
    Cr = w1.shape[0]
    HW = H * W

    if transport_dtype is None:
        transport_dtype = x.dtype
    x_flat = x.reshape(B, C, HW)
    if x_flat.dtype != transport_dtype:
        x_flat = x_flat.astype(transport_dtype)     # opt-in only
    w1t = w1.T.astype(jnp.float32)                  # (C, Cr)
    w2t = w2.T.astype(jnp.float32)                  # (Cr, C)

    itemsize = jnp.dtype(transport_dtype).itemsize
    budget, base_limit, cap = _budgets(x_block_bytes)
    bt, hw_tile = _choose_tiles(B, C, HW, itemsize, budget)
    grid = (B // bt, pl.cdiv(HW, hw_tile))          # (parallel batch, arbitrary spatial)

    # Scoped-VMEM limit: cover the actual double-buffered footprint.
    tile_bytes = bt * C * hw_tile * itemsize
    extras = 2 * (2 * C * Cr * 4)          # two weight buffers, double-buffered
    extras += 2 * (bt * C * 4)             # output block, double-buffered
    extras += 2 * (bt * C * 4)             # sum/max accumulators
    vmem_needed = 2 * tile_bytes + extras + (2 << 20)
    vmem_limit = int(min(cap - (8 << 20), max(base_limit, vmem_needed)))

    kernel = functools.partial(_channel_attention_kernel,
                               hw_total=HW, hw_tile=hw_tile)

    cost = pl.CostEstimate(
        flops=2 * B * C * HW + 8 * B * C * Cr,
        transcendentals=B * C,
        bytes_accessed=B * C * HW * itemsize + 2 * C * Cr * 4 + B * C * 4,
    )

    out = pl.pallas_call(
        kernel,
        out_shape=jax.ShapeDtypeStruct((B, 1, C), jnp.float32),
        grid_spec=pltpu.PrefetchScalarGridSpec(
            num_scalar_prefetch=0,
            grid=grid,
            in_specs=[
                pl.BlockSpec((bt, C, hw_tile), lambda b, s: (b, 0, s)),
                pl.BlockSpec((C, Cr), lambda b, s: (0, 0)),
                pl.BlockSpec((Cr, C), lambda b, s: (0, 0)),
            ],
            out_specs=pl.BlockSpec((bt, 1, C), lambda b, s: (b, 0, 0)),
            scratch_shapes=[
                pltpu.VMEM((bt, C), jnp.float32),   # running sum
                pltpu.VMEM((bt, C), jnp.float32),   # running max
            ],
        ),
        compiler_params=pltpu.CompilerParams(
            dimension_semantics=("parallel", "arbitrary"),
            vmem_limit_bytes=vmem_limit,
        ),
        cost_estimate=cost,
    )(x_flat, w1t, w2t)

    return out.reshape(B, C, 1, 1)


def channel_attention_ref(x, w1, w2):
    """Pure-JAX reference mirroring the PyTorch ChannelAttention.forward."""
    avg = jnp.mean(x, axis=(2, 3))                       # (B, C)
    mx = jnp.max(x, axis=(2, 3))                         # (B, C)

    def mlp(p):                                          # fc2(relu(fc1(p)))
        return jnp.maximum(p @ w1.T, 0.0) @ w2.T

    out = jax.nn.sigmoid(mlp(avg) + mlp(mx))             # (B, C)
    return out[:, :, None, None]


# TODO(synk): the surrounding `network` conv / BatchNorm / ConvTranspose /
# SpatialAttention stack is not kernelized here; this kernel covers the
# ChannelAttention submodule only.

if __name__ == "__main__":
    # Module config: in_planes=16, ratio=8  ->  hidden = 2
    B, C, H, W = 2, 16, 16, 16
    ratio = 8
    Cr = C // ratio

    key = jax.random.PRNGKey(0)
    kx, k1, k2 = jax.random.split(key, 3)

    x = jax.random.normal(kx, (B, C, H, W), dtype=jnp.float32)
    # Deterministic synthetic weights (shapes from nn.Conv2d(C, Cr, 1) / (C, Cr, 1)).
    w1 = jax.random.normal(k1, (Cr, C), dtype=jnp.float32) * (1.0 / jnp.sqrt(C))
    w2 = jax.random.normal(k2, (C, Cr), dtype=jnp.float32) * (1.0 / jnp.sqrt(Cr))

    # 1) Default path: f32 transport (no wrapper cast), auto tiling.
    ref = channel_attention_ref(x, w1, w2)
    out = jax.block_until_ready(channel_attention(x, w1, w2))
    assert out.shape == (B, C, 1, 1)
    assert jnp.allclose(out, ref, atol=1e-5, rtol=1e-5), "f32 mismatch"

    # 2) Force multi-step spatial reduction with a partial (masked) tail tile
    #    by using a non-128-multiple HW and a tiny per-buffer budget.
    H2, W2 = 12, 12                                   # HW = 144 -> tiles 128 + 16
    x2 = jax.random.normal(jax.random.PRNGKey(1), (B, C, H2, W2), dtype=jnp.float32)
    ref2 = channel_attention_ref(x2, w1, w2)
    out2 = jax.block_until_ready(
        channel_attention(x2, w1, w2, x_block_bytes=4096))
    assert jnp.allclose(out2, ref2, atol=1e-5, rtol=1e-5), "masked-tail mismatch"

    # 3) Opt-in bf16 transport path (validated against a bf16-rounded reference).
    out_bf = jax.block_until_ready(
        channel_attention(x, w1, w2, transport_dtype=jnp.bfloat16))
    ref_bf = channel_attention_ref(x.astype(jnp.bfloat16).astype(jnp.float32), w1, w2)
    assert jnp.allclose(out_bf, ref_bf, atol=1e-4, rtol=1e-4), "bf16 mismatch"

    print("KERNEL_OK")
</pallas_src>

<mosaic_0001>
module attributes {stable_mosaic.version = 11 : i64} {
  func.func @_channel_attention_kernel(%arg0: i32, %arg1: i32, %arg2: memref<1x16x256xf32, #tpu.memory_space<vmem>>, %arg3: memref<16x2xf32, #tpu.memory_space<vmem>>, %arg4: memref<2x16xf32, #tpu.memory_space<vmem>>, %arg5: memref<1x1x16xf32, #tpu.memory_space<vmem>>, %arg6: memref<1x16xf32, #tpu.memory_space<vmem>>, %arg7: memref<1x16xf32, #tpu.memory_space<vmem>>) attributes {dimension_semantics = [#tpu.dimension_semantics<parallel>, #tpu.dimension_semantics<arbitrary>], iteration_bounds = array<i64: 2, 1>, scalar_prefetch = 0 : i64, scratch_operands = 2 : i64, tpu.core_type = #tpu.core_type<tc>, window_params = [{transform_indices = @transform_0, window_bounds = array<i64: 1, 16, 256>}, {pipeline_mode = #tpu.pipeline_mode<synchronous>, transform_indices = @transform_1, window_bounds = array<i64: 16, 2>}, {pipeline_mode = #tpu.pipeline_mode<synchronous>, transform_indices = @transform_2, window_bounds = array<i64: 2, 16>}, {transform_indices = @transform_3, window_bounds = array<i64: 1, 1, 16>}]} {
    %c0_i32 = arith.constant 0 : i32
    %0 = arith.cmpi eq, %arg1, %c0_i32 : i32
    %1 = arith.extui %0 : i1 to i32
    %c0_i32_0 = arith.constant 0 : i32
    %2 = arith.cmpi ne, %1, %c0_i32_0 : i32
    scf.if %2 {
      %cst_14 = arith.constant 0.000000e+00 : f32
      %15 = vector.broadcast %cst_14 : f32 to vector<1x16xf32>
      %c0_15 = arith.constant 0 : index
      %c0_16 = arith.constant 0 : index
      %16 = vector.load %arg6[%c0_15, %c0_16] : memref<1x16xf32, #tpu.memory_space<vmem>>, vector<1x16xf32>
      tpu.vector_store %arg6[%c0_15, %c0_16], %15 {strides = array<i32>} : memref<1x16xf32, #tpu.memory_space<vmem>>, vector<1x16xf32>,
      %cst_17 = arith.constant 0xFF800000 : f32
      %17 = vector.broadcast %cst_17 : f32 to vector<1x16xf32>
      %c0_18 = arith.constant 0 : index
      %c0_19 = arith.constant 0 : index
      %18 = vector.load %arg7[%c0_18, %c0_19] : memref<1x16xf32, #tpu.memory_space<vmem>>, vector<1x16xf32>
      tpu.vector_store %arg7[%c0_18, %c0_19], %17 {strides = array<i32>} : memref<1x16xf32, #tpu.memory_space<vmem>>, vector<1x16xf32>,
    } else {
    }
    %c0 = arith.constant 0 : index
    %c0_1 = arith.constant 0 : index
    %c0_2 = arith.constant 0 : index
    %3 = vector.load %arg2[%c0, %c0_1, %c0_2] : memref<1x16x256xf32, #tpu.memory_space<vmem>>, vector<1x16x256xf32>
    %c0_3 = arith.constant 0 : index
    %c0_4 = arith.constant 0 : index
    %4 = vector.load %arg6[%c0_3, %c0_4] : memref<1x16xf32, #tpu.memory_space<vmem>>, vector<1x16xf32>
    %cst = arith.constant dense<0.000000e+00> : vector<1x16xf32>
    %5 = vector.multi_reduction <add>, %3, %cst [2] : vector<1x16x256xf32> to vector<1x16xf32>
    %6 = arith.addf %4, %5 : vector<1x16xf32>
    %c0_5 = arith.constant 0 : index
    %c0_6 = arith.constant 0 : index
    %7 = vector.load %arg6[%c0_5, %c0_6] : memref<1x16xf32, #tpu.memory_space<vmem>>, vector<1x16xf32>
    tpu.vector_store %arg6[%c0_5, %c0_6], %6 {strides = array<i32>} : memref<1x16xf32, #tpu.memory_space<vmem>>, vector<1x16xf32>,
    %c0_7 = arith.constant 0 : index
    %c0_8 = arith.constant 0 : index
    %8 = vector.load %arg7[%c0_7, %c0_8] : memref<1x16xf32, #tpu.memory_space<vmem>>, vector<1x16xf32>
    %cst_9 = arith.constant dense<0xFF800000> : vector<1x16xf32>
    %9 = vector.multi_reduction <maximumf>, %3, %cst_9 [2] : vector<1x16x256xf32> to vector<1x16xf32>
    %10 = arith.maximumf %8, %9 : vector<1x16xf32>
    %c0_10 = arith.constant 0 : index
    %c0_11 = arith.constant 0 : index
    %11 = vector.load %arg7[%c0_10, %c0_11] : memref<1x16xf32, #tpu.memory_space<vmem>>, vector<1x16xf32>
    tpu.vector_store %arg7[%c0_10, %c0_11], %10 {strides = array<i32>} : memref<1x16xf32, #tpu.memory_space<vmem>>, vector<1x16xf32>,
    %c0_i32_12 = arith.constant 0 : i32
    %12 = arith.cmpi eq, %arg1, %c0_i32_12 : i32
    %13 = arith.extui %12 : i1 to i32
    %c0_i32_13 = arith.constant 0 : i32
    %14 = arith.cmpi ne, %13, %c0_i32_13 : i32
    scf.if %14 {
      %c0_14 = arith.constant 0 : index
      %c0_15 = arith.constant 0 : index
      %15 = vector.load %arg6[%c0_14, %c0_15] : memref<1x16xf32, #tpu.memory_space<vmem>>, vector<1x16xf32>
      %cst_16 = arith.constant 3.906250e-03 : f32
      %16 = vector.broadcast %cst_16 : f32 to vector<1x16xf32>
      %17 = arith.mulf %15, %16 : vector<1x16xf32>
      %c0_17 = arith.constant 0 : index
      %c0_18 = arith.constant 0 : index
      %18 = vector.load %arg7[%c0_17, %c0_18] : memref<1x16xf32, #tpu.memory_space<vmem>>, vector<1x16xf32>
      %19 = tpu.concatenate %17, %18 in 0 : vector<1x16xf32>, vector<1x16xf32> -> vector<2x16xf32>
      %c0_19 = arith.constant 0 : index
      %c0_20 = arith.constant 0 : index
      %20 = vector.load %arg3[%c0_19, %c0_20] : memref<16x2xf32, #tpu.memory_space<vmem>>, vector<16x2xf32>
      %cst_21 = arith.constant dense<0.000000e+00> : vector<2x2xf32>
      %21 = tpu.matmul %19, %20, %cst_21 {dimension_numbers = #tpu.dot_dimension_numbers<[1], [0], [0], [1], [0, 0, 1, 1], [], []>} : vector<2x16xf32>, vector<16x2xf32>, vector<2x2xf32> -> vector<2x2xf32>
      %cst_22 = arith.constant 0.000000e+00 : f32
      %22 = vector.broadcast %cst_22 : f32 to vector<2x2xf32>
      %23 = arith.maximumf %21, %22 : vector<2x2xf32>
      %c0_23 = arith.constant 0 : index
      %c0_24 = arith.constant 0 : index
      %24 = vector.load %arg4[%c0_23, %c0_24] : memref<2x16xf32, #tpu.memory_space<vmem>>, vector<2x16xf32>
      %cst_25 = arith.constant dense<0.000000e+00> : vector<2x16xf32>
      %25 = tpu.matmul %23, %24, %cst_25 {dimension_numbers = #tpu.dot_dimension_numbers<[1], [0], [0], [1], [0, 0, 1, 1], [], []>} : vector<2x2xf32>, vector<2x16xf32>, vector<2x16xf32> -> vector<2x16xf32>
      %26 = vector.extract_strided_slice %25 {offsets = [0, 0], sizes = [1, 16], strides = [1, 1]} : vector<2x16xf32> to vector<1x16xf32>
      %27 = vector.extract_strided_slice %25 {offsets = [1, 0], sizes = [1, 16], strides = [1, 1]} : vector<2x16xf32> to vector<1x16xf32>
      %28 = arith.addf %26, %27 : vector<1x16xf32>
      %29 = arith.negf %28 : vector<1x16xf32>
      %30 = math.exp %29 : vector<1x16xf32>
      %cst_26 = arith.constant 1.000000e+00 : f32
      %31 = vector.broadcast %cst_26 : f32 to vector<1x16xf32>
      %32 = arith.addf %31, %30 : vector<1x16xf32>
      %33 = arith.divf %31, %32 : vector<1x16xf32>
      %c0_27 = arith.constant 0 : index
      %c0_28 = arith.constant 0 : index
      %c0_29 = arith.constant 0 : index
      %34 = vector.load %arg5[%c0_27, %c0_28, %c0_29] : memref<1x1x16xf32, #tpu.memory_space<vmem>>, vector<1x1x16xf32>
      %35 = vector.shape_cast %34 : vector<1x1x16xf32> to vector<1x16xf32>
      %36 = vector.shape_cast %33 : vector<1x16xf32> to vector<1x1x16xf32>
      tpu.vector_store %arg5[%c0_27, %c0_28, %c0_29], %36 {strides = array<i32>} : memref<1x1x16xf32, #tpu.memory_space<vmem>>, vector<1x1x16xf32>,
    } else {
    }
    return
  }
  func.func @transform_0(%arg0: i32, %arg1: i32) -> (i32, i32, i32) {
    %c0_i32 = arith.constant 0 : i32
    %c0_i32_0 = arith.constant 0 : i32
    return %arg0, %c0_i32, %arg1 : i32, i32, i32
  }
  func.func @transform_1(%arg0: i32, %arg1: i32) -> (i32, i32) {
    %c0_i32 = arith.constant 0 : i32
    %c0_i32_0 = arith.constant 0 : i32
    %c0_i32_1 = arith.constant 0 : i32
    return %c0_i32, %c0_i32_0 : i32, i32
  }
  func.func @transform_2(%arg0: i32, %arg1: i32) -> (i32, i32) {
    %c0_i32 = arith.constant 0 : i32
    %c0_i32_0 = arith.constant 0 : i32
    %c0_i32_1 = arith.constant 0 : i32
    return %c0_i32, %c0_i32_0 : i32, i32
  }
  func.func @transform_3(%arg0: i32, %arg1: i32) -> (i32, i32, i32) {
    %c0_i32 = arith.constant 0 : i32
    %c0_i32_0 = arith.constant 0 : i32
    %c0_i32_1 = arith.constant 0 : i32
    return %arg0, %c0_i32, %c0_i32_0 : i32, i32, i32
  }
}

</mosaic_0001>

<llo_original>
// kernel: tpu_custom_call.1
$region0: #{tpu_custom_call.1}
  #allocation0 [shape = 'u32[]', space=smem, size = 0x4, offset = 0x4, fixed_abs, tag = 'smem constant byte address 0x4 - core index']
  #allocation1 [shape = 'u32[144,128]{1,0:T(1,128)}', space=vmem, size = 0x12000, scoped, tag = 'internal scratch']
  #allocation2 [shape = 'f32[1,16]{1,0:T(1,128)}', space=vmem, size = 0x200, scoped, tag = 'scratch operand']
  #allocation3 [shape = 'f32[1,16]{1,0:T(1,128)}', space=vmem, size = 0x200, scoped, tag = 'scratch operand']
  %s0 = inlined_call_operand.hbm [shape: f32[2,16,256], index: 0, kind: input, shape index: {}]
  %s1 = inlined_call_operand.vmem [shape: f32[16,2], index: 1, kind: input, shape index: {}]
  %s2 = inlined_call_operand.vmem [shape: f32[2,16], index: 2, kind: input, shape index: {}]
  %s3 = inlined_call_operand.hbm [shape: f32[2,1,16], index: 3, kind: output, shape index: {}]
  %s4 = sld [smem:[#allocation0]]
  $region57: #{tpu_custom_call.1} parent=0
    _
  %s6 = ssub.s32 1, %s4
  %s7 = scalar_select 0, %s6, %s4
  $region1: #{tpu_custom_call.1} parent=0
    #allocation4 [shape = 'u8[32768]{0}', space=vmem, size = 0x8000, scoped, tag = 'input window, operand 0']
    #allocation5 [shape = 's32[2]{0}', space=sflag, size = 0x8, scoped, tag = 'scoped memory for tpu_custom_call.1']
    #allocation6 [shape = 's32[2]{0}', space=sflag, size = 0x8, scoped, tag = 'scoped memory for tpu_custom_call.1']
    #allocation7 [shape = 'u8[1024]{0}', space=vmem, size = 0x400, scoped, tag = 'output window, operand 0']
    %8 = vsyncpa [#allocation5], 0
    %s9 = scalar_lea.sflag [#allocation5], 1
    %10 = vsyncpa %s9, 0
    %11 = vsyncpa [#allocation6], 0
    %s12 = scalar_lea.sflag [#allocation6], 1
    %13 = vsyncpa %s12, 0
    loop: start=0, step=1, limit=4
    $region2: #{tpu_custom_call.1} parent=1 // loop_pre_header
      _
    $region3: #{tpu_custom_call.1} parent=1 // loop_header
      %s15 = sphi 0, %s19
      %p16 = scmp.ge.s32.totalorder %s15, 4
      %s22 = sphi 0, %s34
      %s23 = sphi 0, %s30
      %s24 = sphi 0, %s22
      %s25 = sphi 0, %s23
      %s26 = sphi 0, %s24
      %s27 = sphi 0, %s25
      %s39 = sphi 0, %s41
      %s42 = sphi 0, %s39
      %s43 = sphi 0, %s42
      %s59 = sphi 0, %s43
      %s63 = sphi 0, %s63
      %s65 = sphi 0, %s63
      %s66 = sphi 0, %s65
      %s80 = sphi 0, %s66
      %s84 = sphi 0, %s84
      %s86 = sphi 0, %s84
      %s87 = sphi 0, %s86
      %s101 = sphi 0, %s87
      %s107 = sphi 0, %s109
      %s110 = sphi 0, %s107
      %s111 = sphi 0, %s110
      %s127 = sphi 0, %s111
    $region4: #{tpu_custom_call.1} parent=1 // loop_header_branch
      %18 = sbr.rel (%p16) target = $region8
    $region5: #{tpu_custom_call.1} parent=1 // loop_body
      %s20 = ssub.s32 %s15, 1
      %s21 = ssub.s32 %s15, 2
      %s28 = sadd.s32 1, %s23
      %p29 = scmp.ge.s32.totalorder %s28, 1
      %s30 = scalar_select %p29, 0, %s28
      %s31 = sadd.s32 1, %s22
      %s32 = scalar_select %p29, %s31, %s22
      %p33 = scmp.ge.s32.totalorder %s32, 2
      %s34 = scalar_select %p33, 0, %s32
      %s35 = ssub.s32 %s22, %s34
      %s36 = ssub.s32 %s23, %s30
      %s37 = sor.u32 %s35, %s36
      %p38 = scmp.eq.s32.totalorder %s37, 0
      %s40 = sadd.s32 %s39, 1
      %s41 = scalar_select %p38, %s39, %s40
      %p44 = pneg %p38
      %p45 = scmp.eq.s32.totalorder %s15, 1
      %p46 = por %p44, %p45
      %p47 = scmp.ne.s32.totalorder %s39, %s42
      %p48 = scmp.eq.s32.totalorder %s15, 0
      %p49 = por %p47, %p48
      %p50 = scmp.ne.s32.totalorder %s39, %s42
      %p51 = scmp.eq.s32.totalorder %s20, 1
      %p52 = por %p50, %p51
      %p53 = scmp.ne.s32.totalorder %s42, %s43
      %p54 = scmp.eq.s32.totalorder %s20, 0
      %p55 = por %p53, %p54
      %p56 = scmp.ne.s32.totalorder %s42, %s43
      %p57 = scmp.eq.s32.totalorder %s21, 1
      %p58 = por %p56, %p57
      %p60 = scmp.ne.s32.totalorder %s43, %s59
      %p61 = scmp.eq.s32.totalorder %s21, 0
      %p62 = por %p60, %p61
      %s64 = sadd.s32 %s63, 1
      %p67 = scmp.eq.s32.totalorder %s15, 1
      %p68 = scmp.ne.s32.totalorder %s63, %s65
      %p69 = scmp.eq.s32.totalorder %s15, 0
      %p70 = por %p68, %p69
      %p71 = scmp.ne.s32.totalorder %s63, %s65
      %p72 = scmp.eq.s32.totalorder %s20, 1
      %p73 = por %p71, %p72
      %p74 = scmp.ne.s32.totalorder %s65, %s66
      %p75 = scmp.eq.s32.totalorder %s20, 0
      %p76 = por %p74, %p75
      %p77 = scmp.ne.s32.totalorder %s65, %s66
      %p78 = scmp.eq.s32.totalorder %s21, 1
      %p79 = por %p77, %p78
      %p81 = scmp.ne.s32.totalorder %s66, %s80
      %p82 = scmp.eq.s32.totalorder %s21, 0
      %p83 = por %p81, %p82
      %s85 = sadd.s32 %s84, 1
      %p88 = scmp.eq.s32.totalorder %s15, 1
      %p89 = scmp.ne.s32.totalorder %s84, %s86
      %p90 = scmp.eq.s32.totalorder %s15, 0
      %p91 = por %p89, %p90
      %p92 = scmp.ne.s32.totalorder %s84, %s86
      %p93 = scmp.eq.s32.totalorder %s20, 1
      %p94 = por %p92, %p93
      %p95 = scmp.ne.s32.totalorder %s86, %s87
      %p96 = scmp.eq.s32.totalorder %s20, 0
      %p97 = por %p95, %p96
      %p98 = scmp.ne.s32.totalorder %s86, %s87
      %p99 = scmp.eq.s32.totalorder %s21, 1
      %p100 = por %p98, %p99
      %p102 = scmp.ne.s32.totalorder %s87, %s101
      %p103 = scmp.eq.s32.totalorder %s21, 0
      %p104 = por %p102, %p103
      %s105 = ssub.s32 %s22, %s34
      %p106 = scmp.eq.s32.totalorder %s105, 0
      %s108 = sadd.s32 %s107, 1
      %s109 = scalar_select %p106, %s107, %s108
      %p112 = pneg %p106
      %p113 = scmp.eq.s32.totalorder %s15, 1
      %p114 = por %p112, %p113
      %p115 = scmp.ne.s32.totalorder %s107, %s110
      %p116 = scmp.eq.s32.totalorder %s15, 0
      %p117 = por %p115, %p116
      %p118 = scmp.ne.s32.totalorder %s107, %s110
      %p119 = scmp.eq.s32.totalorder %s20, 1
      %p120 = por %p118, %p119
      %p121 = scmp.ne.s32.totalorder %s110, %s111
      %p122 = scmp.eq.s32.totalorder %s20, 0
      %p123 = por %p121, %p122
      %p124 = scmp.ne.s32.totalorder %s110, %s111
      %p125 = scmp.eq.s32.totalorder %s21, 1
      %p126 = por %p124, %p125
      %p128 = scmp.ne.s32.totalorder %s111, %s127
      %p129 = scmp.eq.s32.totalorder %s21, 0
      %p130 = por %p128, %p129
      %p131 = scmp.le.s32.totalorder 1, %s15
      %p132 = scmp.lt.s32.totalorder %s15, 3
      %p133 = pnand %p131, %p132
      %p134 = pneg %p133
      // Predicated region
      $region9: #{tpu_custom_call.1} parent=5 // pred_check
        _
      $region10: #{tpu_custom_call.1} parent=5 // pred_check_branch
        %136 = sbr.rel (%p133) target = $region12
      $region11: #{tpu_custom_call.1} parent=5 // pred_region
        %s137 = ssub.s32 %s15, 1
        // Predicated region
        $region13: #{tpu_custom_call.1} parent=11 // pred_check
          %p138 = pneg %p76
        $region14: #{tpu_custom_call.1} parent=11 // pred_check_branch
          %140 = sbr.rel (%p138) target = $region16
        $region15: #{tpu_custom_call.1} parent=11 // pred_region
          _
        $region16: #{tpu_custom_call.1} parent=11 // pred_fallthru
          _
        // Predicated region
        $region17: #{tpu_custom_call.1} parent=11 // pred_check
          %p141 = pneg %p97
        $region18: #{tpu_custom_call.1} parent=11 // pred_check_branch
          %143 = sbr.rel (%p141) target = $region20
        $region19: #{tpu_custom_call.1} parent=11 // pred_region
          _
        $region20: #{tpu_custom_call.1} parent=11 // pred_fallthru
          _
      $region12: #{tpu_custom_call.1} parent=5 // pred_fallthru
        _
      %p144 = scmp.lt.s32.totalorder %s15, 2
      // Predicated region
      $region21: #{tpu_custom_call.1} parent=5 // pred_check
        %p145 = pneg %p144
      $region22: #{tpu_custom_call.1} parent=5 // pred_check_branch
        %147 = sbr.rel (%p145) target = $region24
      $region23: #{tpu_custom_call.1} parent=5 // pred_region
        // Predicated region
        $region25: #{tpu_custom_call.1} parent=23 // pred_check
          %p148 = pneg %p49
        $region26: #{tpu_custom_call.1} parent=23 // pred_check_branch
          %150 = sbr.rel (%p148) target = $region28
        $region27: #{tpu_custom_call.1} parent=23 // pred_region
          %s151 = sand.u32 %s39, 1
          %s152 = scalar_lea.sflag [#allocation5], %s151
          %s153 = sand.u32 %s39, 1
          %s154 = smul.addr %s153, 32
          %s155 = scalar_lea.vmem [#allocation4], %s154
          %s156 = smul.u32 2, %s23
          %s158 = ssub.s32 512, 512
          %159 = vsyncadd %s152, %s158
          %s160 = smul.addr %s22, 4
          %s161 = sadd.s32 %s156, %s160
          %s162 = smul.addr %s161, 128
          %s163 = scalar_lea.hbm %s0, %s162
          %s164 = sshll.u32 %s155, 4
          %s165 = int_to_ptr.vmem [resolvable:$true] %s164
          %170 = dma.hbm_to_vmem [thread:$0]  %s163, 512, %s165, %s152, 256, 256, 16
        $region28: #{tpu_custom_call.1} parent=23 // pred_fallthru
          _
      $region24: #{tpu_custom_call.1} parent=5 // pred_fallthru
        _
      %p171 = scmp.le.s32.totalorder 1, %s15
      %p172 = scmp.lt.s32.totalorder %s15, 3
      %p173 = pnand %p171, %p172
      %p174 = pneg %p173
      // Predicated region
      $region29: #{tpu_custom_call.1} parent=5 // pred_check
        _
      $region30: #{tpu_custom_call.1} parent=5 // pred_check_branch
        %176 = sbr.rel (%p173) target = $region32
      $region31: #{tpu_custom_call.1} parent=5 // pred_region
        %s177 = ssub.s32 %s15, 1
        %s178 = sand.u32 %s42, 1
        %s179 = scalar_lea.sflag [#allocation5], %s178
        %s180 = sand.u32 %s42, 1
        %s181 = smul.addr %s180, 32
        %s182 = scalar_lea.vmem [#allocation4], %s181
        // Predicated region
        $region33: #{tpu_custom_call.1} parent=31 // pred_check
          %p183 = pneg %p55
        $region34: #{tpu_custom_call.1} parent=31 // pred_check_branch
          %185 = sbr.rel (%p183) target = $region36
        $region35: #{tpu_custom_call.1} parent=31 // pred_region
          %186 = dma.done %s179, 512
        $region36: #{tpu_custom_call.1} parent=31 // pred_fallthru
          _
        %s187 = sand.u32 %s42, 1
        %s188 = scalar_lea.sflag [#allocation5], %s187
        %s189 = sand.u32 %s42, 1
        %s190 = smul.addr %s189, 32
        %s191 = scalar_lea.vmem [#allocation4], %s190
        %p192 = pneg %p55
        %p193 = pneg %p52
        %p194 = pneg %p76
        %p195 = pneg %p73
        %p196 = pneg %p97
        %p197 = pneg %p94
        %p198 = pneg %p123
        %p199 = pneg %p120
        %s200 = sand.u32 %s110, 1
        %s201 = scalar_lea.sflag [#allocation6], %s200
        %s202 = sand.u32 %s110, 1
        %s203 = scalar_lea.vmem [#allocation7], %s202
        %s204 = smul.u32 2, %s25
        %p205 = scmp.eq.s32.totalorder %s25, 0
        // Predicated region
        $region37: #{tpu_custom_call.1} parent=31 // pred_check
          %p206 = pneg %p205
        $region38: #{tpu_custom_call.1} parent=31 // pred_check_branch
          %208 = sbr.rel (%p206) target = $region40
        $region39: #{tpu_custom_call.1} parent=31 // pred_region
          %vm209 = vcmask 122880
          %210 = vst.msk [vmem:[#allocation2] sm:$0x1] %vm209, 0.0
          %211 = vst.msk [vmem:[#allocation3] sm:$0x1] %vm209, -inf
        $region40: #{tpu_custom_call.1} parent=31 // pred_fallthru
          _
        %v212 = vld [vmem:[%s182] sm:$0xff]
        %v213 = vld [vmem:[%s182 + $0x8] sm:$0xff]
        %v214 = vld [vmem:[%s182 + $0x10] sm:$0xff]
        %v215 = vld [vmem:[%s182 + $0x18] sm:$0xff]
        %v216 = vld [vmem:[#allocation2] sm:$0x1]
        %v217 = vadd.f32 %v212, %v213
        %218 = vadd.xlane.f32.xlu0 %v217
        %v219 = vpop.xlane.xlu0 %218
        %v220 = vadd.f32 %v214, %v215
        %221 = vadd.xlane.f32.xlu0 %v220
        %v222 = vpop.xlane.xlu0 %221
        %v225 = vlaneseq
        %v226 = vshrl.u32 %v225, 7
        %v227 = vsub.s32 0, %v226
        %v228 = vrot.slane %v219, %v227
        %v229 = vlaneseq
        %v230 = vshrl.u32 %v229, 7
        %v231 = vsub.s32 1, %v230
        %v232 = vrot.slane %v219, %v231
        %v233 = vlaneseq
        %v234 = vshrl.u32 %v233, 7
        %v235 = vsub.s32 2, %v234
        %v236 = vrot.slane %v219, %v235
        %v237 = vlaneseq
        %v238 = vshrl.u32 %v237, 7
        %v239 = vsub.s32 3, %v238
        %v240 = vrot.slane %v219, %v239
        %v241 = vlaneseq
        %v242 = vshrl.u32 %v241, 7
        %v243 = vsub.s32 4, %v242
        %v244 = vrot.slane %v219, %v243
        %v245 = vlaneseq
        %v246 = vshrl.u32 %v245, 7
        %v247 = vsub.s32 5, %v246
        %v248 = vrot.slane %v219, %v247
        %v249 = vlaneseq
        %v250 = vshrl.u32 %v249, 7
        %v251 = vsub.s32 6, %v250
        %v252 = vrot.slane %v219, %v251
        %v253 = vlaneseq
        %v254 = vshrl.u32 %v253, 7
        %v255 = vsub.s32 7, %v254
        %v256 = vrot.slane %v219, %v255
        %v257 = vlaneseq
        %v258 = vshrl.u32 %v257, 7
        %v259 = vsub.s32 0, %v258
        %v260 = vrot.slane %v222, %v259
        %v261 = vlaneseq
        %v262 = vshrl.u32 %v261, 7
        %v263 = vsub.s32 1, %v262
        %v264 = vrot.slane %v222, %v263
        %v265 = vlaneseq
        %v266 = vshrl.u32 %v265, 7
        %v267 = vsub.s32 2, %v266
        %v268 = vrot.slane %v222, %v267
        %v269 = vlaneseq
        %v270 = vshrl.u32 %v269, 7
        %v271 = vsub.s32 3, %v270
        %v272 = vrot.slane %v222, %v271
        %v273 = vlaneseq
        %v274 = vshrl.u32 %v273, 7
        %v275 = vsub.s32 4, %v274
        %v276 = vrot.slane %v222, %v275
        %v277 = vlaneseq
        %v278 = vshrl.u32 %v277, 7
        %v279 = vsub.s32 5, %v278
        %v280 = vrot.slane %v222, %v279
        %v281 = vlaneseq
        %v282 = vshrl.u32 %v281, 7
        %v283 = vsub.s32 6, %v282
        %v284 = vrot.slane %v222, %v283
        %v285 = vlaneseq
        %v286 = vshrl.u32 %v285, 7
        %v287 = vsub.s32 7, %v286
        %v288 = vrot.slane %v222, %v287
        %v289 = vcombine.low %v228, %v232
        %v290 = vcombine.low %v236, %v240
        %v291 = vcombine.low %v244, %v248
        %v292 = vcombine.low %v252, %v256
        %v294 = vunpack.c.l.s4 1966171168
        %v295 = vunpack.c.0.s8 %v294
        %v296 = vlaneseq
        %v297 = vshrl.u32 %v296, 7
        %v298 = vsub.s32 %v295, %v297
        %v299 = vrot.slane %v289, %v298
        %v301 = vunpack.c.l.s4 1966171168
        %v302 = vunpack.c.0.s8 %v301
        %v303 = vlaneseq
        %v304 = vshrl.u32 %v303, 7
        %v305 = vsub.s32 %v302, %v304
        %v306 = vrot.slane %v290, %v305
        %v308 = vunpack.c.l.s4 1966171168
        %v309 = vunpack.c.0.s8 %v308
        %v310 = vlaneseq
        %v311 = vshrl.u32 %v310, 7
        %v312 = vsub.s32 %v309, %v311
        %v313 = vrot.slane %v291, %v312
        %v315 = vunpack.c.l.s4 1966171168
        %v316 = vunpack.c.0.s8 %v315
        %v317 = vlaneseq
        %v318 = vshrl.u32 %v317, 7
        %v319 = vsub.s32 %v316, %v318
        %v320 = vrot.slane %v292, %v319
        %v321 = vcombine.low %v299, %v306
        %v322 = vcombine.low %v313, %v320
        %v324 = vunpack.c.l.s4 1966171168
        %v325 = vunpack.c.0.s8 %v324
        %v326 = vlaneseq
        %v327 = vshrl.u32 %v326, 7
        %v328 = vsub.s32 %v325, %v327
        %v329 = vrot.slane %v321, %v328
        %v331 = vunpack.c.l.s4 1966171168
        %v332 = vunpack.c.0.s8 %v331
        %v333 = vlaneseq
        %v334 = vshrl.u32 %v333, 7
        %v335 = vsub.s32 %v332, %v334
        %v336 = vrot.slane %v322, %v335
        %v337 = vcombine.low %v329, %v336
        %v338 = vcombine.low %v260, %v264
        %v339 = vcombine.low %v268, %v272
        %v340 = vcombine.low %v276, %v280
        %v341 = vcombine.low %v284, %v288
        %v343 = vunpack.c.l.s4 1966171168
        %v344 = vunpack.c.0.s8 %v343
        %v345 = vlaneseq
        %v346 = vshrl.u32 %v345, 7
        %v347 = vsub.s32 %v344, %v346
        %v348 = vrot.slane %v338, %v347
        %v350 = vunpack.c.l.s4 1966171168
        %v351 = vunpack.c.0.s8 %v350
        %v352 = vlaneseq
        %v353 = vshrl.u32 %v352, 7
        %v354 = vsub.s32 %v351, %v353
        %v355 = vrot.slane %v339, %v354
        %v357 = vunpack.c.l.s4 1966171168
        %v358 = vunpack.c.0.s8 %v357
        %v359 = vlaneseq
        %v360 = vshrl.u32 %v359, 7
        %v361 = vsub.s32 %v358, %v360
        %v362 = vrot.slane %v340, %v361
        %v364 = vunpack.c.l.s4 1966171168
        %v365 = vunpack.c.0.s8 %v364
        %v366 = vlaneseq
        %v367 = vshrl.u32 %v366, 7
        %v368 = vsub.s32 %v365, %v367
        %v369 = vrot.slane %v341, %v368
        %v370 = vcombine.low %v348, %v355
        %v371 = vcombine.low %v362, %v369
        %v373 = vunpack.c.l.s4 1966171168
        %v374 = vunpack.c.0.s8 %v373
        %v375 = vlaneseq
        %v376 = vshrl.u32 %v375, 7
        %v377 = vsub.s32 %v374, %v376
        %v378 = vrot.slane %v370, %v377
        %v380 = vunpack.c.l.s4 1966171168
        %v381 = vunpack.c.0.s8 %v380
        %v382 = vlaneseq
        %v383 = vshrl.u32 %v382, 7
        %v384 = vsub.s32 %v381, %v383
        %v385 = vrot.slane %v371, %v384
        %v386 = vcombine.low %v378, %v385
        %387 = vset.pattern.permute.xlu0 0
        %388 = vperm.xlu0 %387, %v337
        %v389 = vpop.permute.xlu0 %388
        %390 = vset.pattern.permute.xlu0 0
        %391 = vperm.xlu0 %390, %v386
        %v392 = vpop.permute.xlu0 %391
        %v393 = vlaneseq
        %v394 = vand.u32 %v393, 127
        %v395 = vlaneseq
        %v396 = vshrl.u32 %v395, 7
        %v397 = vsub.s32 %v394, %v396
        %v398 = vrot.slane %v389, %v397
        %v399 = vadd.s32 %v394, 4294967288
        %v400 = vlaneseq
        %v401 = vshrl.u32 %v400, 7
        %v402 = vsub.s32 %v399, %v401
        %v403 = vrot.slane %v392, %v402
        %vm404 = vcmask 130112
        %v405 = vsel %vm404, %v403, %v398
        %v407 = vunpack.c.l.s4 1966171168
        %v408 = vunpack.c.0.s8 %v407
        %v409 = vlaneseq
        %v410 = vshrl.u32 %v409, 7
        %v411 = vsub.s32 %v408, %v410
        %v412 = vrot.slane %v405, %v411
        %v414 = vunpack.c.l.s4 1966171168
        %v415 = vunpack.c.0.s8 %v414
        %v416 = vlaneseq
        %v417 = vshrl.u32 %v416, 7
        %v418 = vsub.s32 %v415, %v417
        %v419 = vrot.slane %v412, %v418
        %v421 = vadd.f32 %v216, %v419
        %vm422 = vcmask 122880
        %423 = vst.msk [vmem:[#allocation2] sm:$0x1] %vm422, %v421
        %v424 = vld [vmem:[#allocation3] sm:$0x1]
        %v425 = vmax.f32 %v212, %v213
        %426 = vmax.xlane.f32.xlu0 %v425
        %v427 = vpop.xlane.xlu0 %426
        %v428 = vmax.f32 %v214, %v215
        %429 = vmax.xlane.f32.xlu0 %v428
        %v430 = vpop.xlane.xlu0 %429
        %v433 = vlaneseq
        %v434 = vshrl.u32 %v433, 7
        %v435 = vsub.s32 0, %v434
        %v436 = vrot.slane %v427, %v435
        %v437 = vlaneseq
        %v438 = vshrl.u32 %v437, 7
        %v439 = vsub.s32 1, %v438
        %v440 = vrot.slane %v427, %v439
        %v441 = vlaneseq
        %v442 = vshrl.u32 %v441, 7
        %v443 = vsub.s32 2, %v442
        %v444 = vrot.slane %v427, %v443
        %v445 = vlaneseq
        %v446 = vshrl.u32 %v445, 7
        %v447 = vsub.s32 3, %v446
        %v448 = vrot.slane %v427, %v447
        %v449 = vlaneseq
        %v450 = vshrl.u32 %v449, 7
        %v451 = vsub.s32 4, %v450
        %v452 = vrot.slane %v427, %v451
        %v453 = vlaneseq
        %v454 = vshrl.u32 %v453, 7
        %v455 = vsub.s32 5, %v454
        %v456 = vrot.slane %v427, %v455
        %v457 = vlaneseq
        %v458 = vshrl.u32 %v457, 7
        %v459 = vsub.s32 6, %v458
        %v460 = vrot.slane %v427, %v459
        %v461 = vlaneseq
        %v462 = vshrl.u32 %v461, 7
        %v463 = vsub.s32 7, %v462
        %v464 = vrot.slane %v427, %v463
        %v465 = vlaneseq
        %v466 = vshrl.u32 %v465, 7
        %v467 = vsub.s32 0, %v466
        %v468 = vrot.slane %v430, %v467
        %v469 = vlaneseq
        %v470 = vshrl.u32 %v469, 7
        %v471 = vsub.s32 1, %v470
        %v472 = vrot.slane %v430, %v471
        %v473 = vlaneseq
        %v474 = vshrl.u32 %v473, 7
        %v475 = vsub.s32 2, %v474
        %v476 = vrot.slane %v430, %v475
        %v477 = vlaneseq
        %v478 = vshrl.u32 %v477, 7
        %v479 = vsub.s32 3, %v478
        %v480 = vrot.slane %v430, %v479
        %v481 = vlaneseq
        %v482 = vshrl.u32 %v481, 7
        %v483 = vsub.s32 4, %v482
        %v484 = vrot.slane %v430, %v483
        %v485 = vlaneseq
        %v486 = vshrl.u32 %v485, 7
        %v487 = vsub.s32 5, %v486
        %v488 = vrot.slane %v430, %v487
        %v489 = vlaneseq
        %v490 = vshrl.u32 %v489, 7
        %v491 = vsub.s32 6, %v490
        %v492 = vrot.slane %v430, %v491
        %v493 = vlaneseq
        %v494 = vshrl.u32 %v493, 7
        %v495 = vsub.s32 7, %v494
        %v496 = vrot.slane %v430, %v495
        %v497 = vcombine.low %v436, %v440
        %v498 = vcombine.low %v444, %v448
        %v499 = vcombine.low %v452, %v456
        %v500 = vcombine.low %v460, %v464
        %v502 = vunpack.c.l.s4 1966171168
        %v503 = vunpack.c.0.s8 %v502
        %v504 = vlaneseq
        %v505 = vshrl.u32 %v504, 7
        %v506 = vsub.s32 %v503, %v505
        %v507 = vrot.slane %v497, %v506
        %v509 = vunpack.c.l.s4 1966171168
        %v510 = vunpack.c.0.s8 %v509
        %v511 = vlaneseq
        %v512 = vshrl.u32 %v511, 7
        %v513 = vsub.s32 %v510, %v512
        %v514 = vrot.slane %v498, %v513
        %v516 = vunpack.c.l.s4 1966171168
        %v517 = vunpack.c.0.s8 %v516
        %v518 = vlaneseq
        %v519 = vshrl.u32 %v518, 7
        %v520 = vsub.s32 %v517, %v519
        %v521 = vrot.slane %v499, %v520
        %v523 = vunpack.c.l.s4 1966171168
        %v524 = vunpack.c.0.s8 %v523
        %v525 = vlaneseq
        %v526 = vshrl.u32 %v525, 7
        %v527 = vsub.s32 %v524, %v526
        %v528 = vrot.slane %v500, %v527
        %v529 = vcombine.low %v507, %v514
        %v530 = vcombine.low %v521, %v528
        %v532 = vunpack.c.l.s4 1966171168
        %v533 = vunpack.c.0.s8 %v532
        %v534 = vlaneseq
        %v535 = vshrl.u32 %v534, 7
        %v536 = vsub.s32 %v533, %v535
        %v537 = vrot.slane %v529, %v536
        %v539 = vunpack.c.l.s4 1966171168
        %v540 = vunpack.c.0.s8 %v539
        %v541 = vlaneseq
        %v542 = vshrl.u32 %v541, 7
        %v543 = vsub.s32 %v540, %v542
        %v544 = vrot.slane %v530, %v543
        %v545 = vcombine.low %v537, %v544
        %v546 = vcombine.low %v468, %v472
        %v547 = vcombine.low %v476, %v480
        %v548 = vcombine.low %v484, %v488
        %v549 = vcombine.low %v492, %v496
        %v551 = vunpack.c.l.s4 1966171168
        %v552 = vunpack.c.0.s8 %v551
        %v553 = vlaneseq
        %v554 = vshrl.u32 %v553, 7
        %v555 = vsub.s32 %v552, %v554
        %v556 = vrot.slane %v546, %v555
        %v558 = vunpack.c.l.s4 1966171168
        %v559 = vunpack.c.0.s8 %v558
        %v560 = vlaneseq
        %v561 = vshrl.u32 %v560, 7
        %v562 = vsub.s32 %v559, %v561
        %v563 = vrot.slane %v547, %v562
        %v565 = vunpack.c.l.s4 1966171168
        %v566 = vunpack.c.0.s8 %v565
        %v567 = vlaneseq
        %v568 = vshrl.u32 %v567, 7
        %v569 = vsub.s32 %v566, %v568
        %v570 = vrot.slane %v548, %v569
        %v572 = vunpack.c.l.s4 1966171168
        %v573 = vunpack.c.0.s8 %v572
        %v574 = vlaneseq
        %v575 = vshrl.u32 %v574, 7
        %v576 = vsub.s32 %v573, %v575
        %v577 = vrot.slane %v549, %v576
        %v578 = vcombine.low %v556, %v563
        %v579 = vcombine.low %v570, %v577
        %v581 = vunpack.c.l.s4 1966171168
        %v582 = vunpack.c.0.s8 %v581
        %v583 = vlaneseq
        %v584 = vshrl.u32 %v583, 7
        %v585 = vsub.s32 %v582, %v584
        %v586 = vrot.slane %v578, %v585
        %v588 = vunpack.c.l.s4 1966171168
        %v589 = vunpack.c.0.s8 %v588
        %v590 = vlaneseq
        %v591 = vshrl.u32 %v590, 7
        %v592 = vsub.s32 %v589, %v591
        %v593 = vrot.slane %v579, %v592
        %v594 = vcombine.low %v586, %v593
        %595 = vset.pattern.permute.xlu0 0
        %596 = vperm.xlu0 %595, %v545
        %v597 = vpop.permute.xlu0 %596
        %598 = vset.pattern.permute.xlu0 0
        %599 = vperm.xlu0 %598, %v594
        %v600 = vpop.permute.xlu0 %599
        %v601 = vlaneseq
        %v602 = vshrl.u32 %v601, 7
        %v603 = vsub.s32 %v394, %v602
        %v604 = vrot.slane %v597, %v603
        %v605 = vlaneseq
        %v606 = vshrl.u32 %v605, 7
        %v607 = vsub.s32 %v399, %v606
        %v608 = vrot.slane %v600, %v607
        %v609 = vsel %vm404, %v608, %v604
        %v611 = vunpack.c.l.s4 1966171168
        %v612 = vunpack.c.0.s8 %v611
        %v613 = vlaneseq
        %v614 = vshrl.u32 %v613, 7
        %v615 = vsub.s32 %v612, %v614
        %v616 = vrot.slane %v609, %v615
        %v618 = vunpack.c.l.s4 1966171168
        %v619 = vunpack.c.0.s8 %v618
        %v620 = vlaneseq
        %v621 = vshrl.u32 %v620, 7
        %v622 = vsub.s32 %v619, %v621
        %v623 = vrot.slane %v616, %v622
        %v625 = vmax.f32 %v424, %v623
        %626 = vst.msk [vmem:[#allocation3] sm:$0x1] %vm422, %v625
        // Predicated region
        $region41: #{tpu_custom_call.1} parent=31 // pred_check
          %p627 = pneg %p205
        $region42: #{tpu_custom_call.1} parent=31 // pred_check_branch
          %629 = sbr.rel (%p627) target = $region44
        $region43: #{tpu_custom_call.1} parent=31 // pred_region
          %v630 = vld [vmem:[#allocation2] sm:$0x1]
          %v631 = vmul.f32 %v630, 0.00390625
          %v632 = vld [vmem:[#allocation3] sm:$0x1]
          %v634 = vlaneseq
          %v635 = vshrl.u32 %v634, 7
          %v636 = vsub.s32 0, %v635
          %v637 = vrot.slane %v632, %v636
          %vm639 = vcmask 1040384
          %v640 = vsel %vm639, %v631, %v637
          %v641 = vld [vmem:[%s1] sm:$0xff]
          %v642 = vld [vmem:[%s1 + $0x8] sm:$0xff]
          %vm643 = vcmask 130048
          %v645 = vsel %vm643, %v640, 0
          %647 = vmatprep.subr.mxu0 0.0
          %648 = vmatpush1.msra.mxu0 0.0
          %649 = vmatprep.subr.mxu0 0.0
          %650 = vmatpush1.msra.mxu0 0.0
          %651 = vmatprep.subr.mxu0 0.0
          %652 = vmatpush1.msra.mxu0 0.0
          %653 = vmatprep.subr.mxu0 0.0
          %654 = vmatpush1.msra.mxu0 0.0
          %655 = vmatprep.subr.mxu0 0.0
          %656 = vmatpush1.msra.mxu0 0.0
          %657 = vmatprep.subr.mxu0 0.0
          %658 = vmatpush1.msra.mxu0 0.0
          %659 = vmatprep.subr.mxu0 0.0
          %660 = vmatpush1.msra.mxu0 0.0
          %661 = vmatprep.subr.mxu0 0.0
          %662 = vmatpush1.msra.mxu0 0.0
          %663 = vmatprep.subr.mxu0 0.0
          %664 = vmatpush1.msra.mxu0 0.0
          %665 = vmatprep.subr.mxu0 0.0
          %666 = vmatpush1.msra.mxu0 0.0
          %667 = vmatprep.subr.mxu0 0.0
          %668 = vmatpush1.msra.mxu0 0.0
          %669 = vmatprep.subr.mxu0 0.0
          %670 = vmatpush1.msra.mxu0 0.0
          %671 = vmatprep.subr.mxu0 0.0
          %672 = vmatpush1.msra.mxu0 0.0
          %673 = vmatprep.subr.mxu0 0.0
          %674 = vmatpush1.msra.mxu0 0.0
          %675 = vmatprep.subr.mxu0 0.0
          %676 = vmatpush1.msra.mxu0 %v642
          %677 = vmatprep.subr.mxu0 0.0
          %678 = vmatpush1.msra.mxu0 %v641
          %679 = vmatprep.subr.mxu0 0.0
          %680 = vmatpush2.msra.mxu0 0.0
          %681 = vmatprep.subr.mxu0 0.0
          %682 = vmatpush2.msra.mxu0 0.0
          %683 = vmatprep.subr.mxu0 0.0
          %684 = vmatpush2.msra.mxu0 0.0
          %685 = vmatprep.subr.mxu0 0.0
          %686 = vmatpush2.msra.mxu0 0.0
          %687 = vmatprep.subr.mxu0 0.0
          %688 = vmatpush2.msra.mxu0 0.0
          %689 = vmatprep.subr.mxu0 0.0
          %690 = vmatpush2.msra.mxu0 0.0
          %691 = vmatprep.subr.mxu0 0.0
          %692 = vmatpush2.msra.mxu0 0.0
          %693 = vmatprep.subr.mxu0 0.0
          %694 = vmatpush2.msra.mxu0 0.0
          %695 = vmatprep.subr.mxu0 0.0
          %696 = vmatpush2.msra.mxu0 0.0
          %697 = vmatprep.subr.mxu0 0.0
          %698 = vmatpush2.msra.mxu0 0.0
          %699 = vmatprep.subr.mxu0 0.0
          %700 = vmatpush2.msra.mxu0 0.0
          %701 = vmatprep.subr.mxu0 0.0
          %702 = vmatpush2.msra.mxu0 0.0
          %703 = vmatprep.subr.mxu0 0.0
          %704 = vmatpush2.msra.mxu0 0.0
          %705 = vmatprep.subr.mxu0 0.0
          %706 = vmatpush2.msra.mxu0 0.0
          %707 = vmatprep.subr.mxu0 0.0
          %708 = vmatpush2.msra.mxu0 0.0
          %709 = vmatprep.subr.mxu0 0.0
          %710 = vmatpush2.msra.mxu0 0.0
          %711 = vmatprep.mubr.f32.mxu0 0.0
          %712 = vmatmul.mubr.f32.gmra.mxu0 %v645
          %v713 = vpop.f32.mrf.mxu0
          %v714 = vadd.f32 0.0, %v713
          %v715 = vpop.f32.mrf.mxu0
          %716 = vdwg.mxu0
          %v717 = vmax.f32 %v714, 0.0
          %v718 = vld [vmem:[%s2] sm:$0x3]
          %vm719 = vcmask 15360
          %v721 = vsel %vm719, %v717, 0
          %vm723 = vcmask 1041408
          %v725 = vsel %vm723, %v718, 0
          %727 = vmatprep.subr.mxu0 0.0
          %728 = vmatpush1.msra.mxu0 0.0
          %729 = vmatprep.subr.mxu0 0.0
          %730 = vmatpush1.msra.mxu0 0.0
          %731 = vmatprep.subr.mxu0 0.0
          %732 = vmatpush1.msra.mxu0 0.0
          %733 = vmatprep.subr.mxu0 0.0
          %734 = vmatpush1.msra.mxu0 0.0
          %735 = vmatprep.subr.mxu0 0.0
          %736 = vmatpush1.msra.mxu0 0.0
          %737 = vmatprep.subr.mxu0 0.0
          %738 = vmatpush1.msra.mxu0 0.0
          %739 = vmatprep.subr.mxu0 0.0
          %740 = vmatpush1.msra.mxu0 0.0
          %741 = vmatprep.subr.mxu0 0.0
          %742 = vmatpush1.msra.mxu0 0.0
          %743 = vmatprep.subr.mxu0 0.0
          %744 = vmatpush1.msra.mxu0 0.0
          %745 = vmatprep.subr.mxu0 0.0
          %746 = vmatpush1.msra.mxu0 0.0
          %747 = vmatprep.subr.mxu0 0.0
          %748 = vmatpush1.msra.mxu0 0.0
          %749 = vmatprep.subr.mxu0 0.0
          %750 = vmatpush1.msra.mxu0 0.0
          %751 = vmatprep.subr.mxu0 0.0
          %752 = vmatpush1.msra.mxu0 0.0
          %753 = vmatprep.subr.mxu0 0.0
          %754 = vmatpush1.msra.mxu0 0.0
          %755 = vmatprep.subr.mxu0 0.0
          %756 = vmatpush1.msra.mxu0 0.0
          %757 = vmatprep.subr.mxu0 0.0
          %758 = vmatpush1.msra.mxu0 %v725
          %759 = vmatprep.subr.mxu0 0.0
          %760 = vmatpush2.msra.mxu0 0.0
          %761 = vmatprep.subr.mxu0 0.0
          %762 = vmatpush2.msra.mxu0 0.0
          %763 = vmatprep.subr.mxu0 0.0
          %764 = vmatpush2.msra.mxu0 0.0
          %765 = vmatprep.subr.mxu0 0.0
          %766 = vmatpush2.msra.mxu0 0.0
          %767 = vmatprep.subr.mxu0 0.0
          %768 = vmatpush2.msra.mxu0 0.0
          %769 = vmatprep.subr.mxu0 0.0
          %770 = vmatpush2.msra.mxu0 0.0
          %771 = vmatprep.subr.mxu0 0.0
          %772 = vmatpush2.msra.mxu0 0.0
          %773 = vmatprep.subr.mxu0 0.0
          %774 = vmatpush2.msra.mxu0 0.0
          %775 = vmatprep.subr.mxu0 0.0
          %776 = vmatpush2.msra.mxu0 0.0
          %777 = vmatprep.subr.mxu0 0.0
          %778 = vmatpush2.msra.mxu0 0.0
          %779 = vmatprep.subr.mxu0 0.0
          %780 = vmatpush2.msra.mxu0 0.0
          %781 = vmatprep.subr.mxu0 0.0
          %782 = vmatpush2.msra.mxu0 0.0
          %783 = vmatprep.subr.mxu0 0.0
          %784 = vmatpush2.msra.mxu0 0.0
          %785 = vmatprep.subr.mxu0 0.0
          %786 = vmatpush2.msra.mxu0 0.0
          %787 = vmatprep.subr.mxu0 0.0
          %788 = vmatpush2.msra.mxu0 0.0
          %789 = vmatprep.subr.mxu0 0.0
          %790 = vmatpush2.msra.mxu0 0.0
          %791 = vmatprep.mubr.f32.mxu0 0.0
          %792 = vmatmul.mubr.f32.gmra.mxu0 %v721
          %v793 = vpop.f32.mrf.mxu0
          %v794 = vadd.f32 0.0, %v793
          %v795 = vpop.f32.mrf.mxu0
          %796 = vdwg.mxu0
          %v798 = vrot.slane %v794, 1
          %v800 = vadd.f32 %v794, %v798
          %v801 = vxor.u32 %v800, 2147483648
          %v802 = vmul.f32 %v801, 1.442695
          %v803 = vpow.pop %v802
          %v804 = vadd.f32 %v803, 1.0
          %v805 = vrcp.pop %v804
          %v806 = vmul.f32 1.0, %v805
          %807 = vst.msk [vmem:[%s203] sm:$0x1] %vm422, %v806
        $region44: #{tpu_custom_call.1} parent=31 // pred_fallthru
          _
        %s808 = sand.u32 %s110, 1
        %s809 = scalar_lea.sflag [#allocation6], %s808
        %s810 = sand.u32 %s110, 1
        %s811 = scalar_lea.vmem [#allocation7], %s810
        // Predicated region
        $region45: #{tpu_custom_call.1} parent=31 // pred_check
          %p812 = pneg %p120
        $region46: #{tpu_custom_call.1} parent=31 // pred_check_branch
          %814 = sbr.rel (%p812) target = $region48
        $region47: #{tpu_custom_call.1} parent=31 // pred_region
          %s816 = ssub.s32 16, 16
          %817 = vsyncadd %s809, %s816
          %s818 = smul.addr %s24, 16
          %s819 = scalar_lea.hbm %s3, %s818
          %s821 = sshll.u32 %s811, 4
          %s822 = int_to_ptr.vmem [resolvable:$true] %s821
          %824 = dma.vmem_to_hbm [thread:$0]  %s822, 16, %s819, %s809
        $region48: #{tpu_custom_call.1} parent=31 // pred_fallthru
          _
      $region32: #{tpu_custom_call.1} parent=5 // pred_fallthru
        _
      %p825 = scmp.le.s32.totalorder 2, %s15
      // Predicated region
      $region49: #{tpu_custom_call.1} parent=5 // pred_check
        %p826 = pneg %p825
      $region50: #{tpu_custom_call.1} parent=5 // pred_check_branch
        %828 = sbr.rel (%p826) target = $region52
      $region51: #{tpu_custom_call.1} parent=5 // pred_region
        %s829 = ssub.s32 %s15, 2
        // Predicated region
        $region53: #{tpu_custom_call.1} parent=51 // pred_check
          %p830 = pneg %p126
        $region54: #{tpu_custom_call.1} parent=51 // pred_check_branch
          %832 = sbr.rel (%p830) target = $region56
        $region55: #{tpu_custom_call.1} parent=51 // pred_region
          %s833 = sand.u32 %s111, 1
          %s834 = scalar_lea.sflag [#allocation6], %s833
          %s835 = sand.u32 %s111, 1
          %s836 = scalar_lea.vmem [#allocation7], %s835
          %837 = dma.done %s834, 16
        $region56: #{tpu_custom_call.1} parent=51 // pred_fallthru
          _
      $region52: #{tpu_custom_call.1} parent=5 // pred_fallthru
        _
    $region6: #{tpu_custom_call.1} parent=1 // loop_footer
      %s19 = sadd.s32 1, %s15
    $region7: #{tpu_custom_call.1} parent=1 // loop_footer_branch
      %14 = sbr.rel target = $region3
    $region8: #{tpu_custom_call.1} parent=1 // loop_exit
      _
    %838 = vsyncpa [#allocation5], 1
    %s839 = scalar_lea.sflag [#allocation5], 1
    %840 = vsyncpa %s839, 1
    %841 = vsyncpa [#allocation6], 1
    %s842 = scalar_lea.sflag [#allocation6], 1
    %843 = vsyncpa %s842, 1

</llo_original>
